<compile_context>
chip_gen: v7x
topology: tpu7x:2x2x1
jax: 0.10.0
libtpu: 0.0.40
codegen_flags: <defaults>
</compile_context>

<pallas_src>
import jax
import jax.numpy as jnp
from jax.experimental import pallas as pl
from jax.experimental.pallas import tpu as pltpu


# ---------------------------------------------------------------------------
# Kernels
# ---------------------------------------------------------------------------

def _review_attention_small_kernel(r_ref, o_ref):
    # Whole (B, M, H2) block resident in VMEM.  Softmax over a size-1 axis is
    # identically 1.0, so the output is the unweighted sum over M.  Upcast to
    # f32 for accumulation, cast back on the single lane-slab store.
    o_ref[...] = jnp.sum(r_ref[...].astype(jnp.float32), axis=1).astype(o_ref.dtype)


def _review_attention_tiled_kernel(r_ref, o_ref, acc_ref):
    # grid = (B // TB, M // TM).  The trailing M axis is a reduction: the output
    # block is resident across it and an f32 accumulator is initialized on the
    # first M step and stored (with a dtype cast) on the last.
    mi = pl.program_id(1)

    @pl.when(mi == 0)
    def _():
        acc_ref[...] = jnp.zeros_like(acc_ref)

    acc_ref[...] += jnp.sum(r_ref[...].astype(jnp.float32), axis=1)

    @pl.when(mi == pl.num_programs(1) - 1)
    def _():
        o_ref[...] = acc_ref[...].astype(o_ref.dtype)


# ---------------------------------------------------------------------------
# Wrapper
# ---------------------------------------------------------------------------

def _largest_divisor_leq(n, cap):
    cap = int(max(1, min(n, cap)))
    for d in range(cap, 0, -1):
        if n % d == 0:
            return d
    return 1


# Conservative per-input-block budget.  Double-buffered (2 x 4 MiB) plus the tiny
# f32 accumulator / output slabs stays well under the smallest default scoped
# VMEM limit across generations (v5e: 16 MiB, v6e/v7x: 32 MiB scoped; v7x has
# only 64 MiB physical VMEM).
_BLOCK_BUDGET_BYTES = 4 * 1024 * 1024
# Below this total input size a single no-grid invocation (whole array in VMEM,
# one XLU reduce, one lane-slab store) beats any pipelining machinery.
_SMALL_TOTAL_BYTES = 1 * 1024 * 1024


def review_attention(query, reviews, wq, wr):
    """Matches Review_Attention.forward.

    query:   (B, 1, H)   -- mathematically dead (size-1 softmax), kept for API parity
    reviews: (B, M, 2H)
    wq:      (1, H)      -- query_proj.weight (bias=False), dead (see above)
    wr:      (1, 2H)     -- review_proj.weight (bias=False), dead (see above)
    returns: (B, 2H) in reviews.dtype
    """
    # Guard the algebraic shortcut: it is only valid while both projections map
    # to a single logit (softmax axis of size 1).
    assert wq.shape[0] == 1 and wr.shape[0] == 1, (
        "Review_Attention shortcut requires out_features == 1 projections")
    del query, wq, wr

    B, M, H2 = reviews.shape
    out_dtype = reviews.dtype
    elt_bytes = reviews.dtype.itemsize
    total_bytes = B * M * H2 * elt_bytes
    out_shape = jax.ShapeDtypeStruct((B, H2), out_dtype)

    if total_bytes <= _SMALL_TOTAL_BYTES:
        # Tiny input: single block, no grid, no per-step pipeline overhead.
        return pl.pallas_call(
            _review_attention_small_kernel,
            out_shape=out_shape,
            in_specs=[pl.BlockSpec(memory_space=pltpu.MemorySpace.VMEM)],
            out_specs=pl.BlockSpec(memory_space=pltpu.MemorySpace.VMEM),
        )(reviews)

    # Tiled, auto-pipelined path.  Full H2 per block; prefer full M per block
    # (pure grid-over-B) and only split M once a single batch row of reviews
    # exceeds the per-block VMEM budget.
    max_rows = max(1, _BLOCK_BUDGET_BYTES // (H2 * elt_bytes))
    if M <= max_rows:
        tm = M
        tb = _largest_divisor_leq(B, max_rows // M)
    else:
        tb = 1
        tm = _largest_divisor_leq(M, max_rows)

    grid = (B // tb, M // tm)
    # Shard the independent B axis across TensorCores (v7x megacore) only when
    # there is more than one batch tile; M is a reduction -> "arbitrary".
    b_sem = "parallel" if grid[0] > 1 else "arbitrary"

    return pl.pallas_call(
        _review_attention_tiled_kernel,
        out_shape=out_shape,
        grid_spec=pltpu.PrefetchScalarGridSpec(
            num_scalar_prefetch=0,
            grid=grid,
            in_specs=[pl.BlockSpec((tb, tm, H2), lambda i, k: (i, k, 0))],
            out_specs=pl.BlockSpec((tb, H2), lambda i, k: (i, 0)),
            scratch_shapes=[pltpu.VMEM((tb, H2), jnp.float32)],
        ),
        compiler_params=pltpu.CompilerParams(
            dimension_semantics=(b_sem, "arbitrary")),
    )(reviews)


# ---------------------------------------------------------------------------
# Pure-JAX reference (mirrors the PyTorch forward literally)
# ---------------------------------------------------------------------------

def review_attention_ref(query, reviews, wq, wr):
    B, M, H2 = reviews.shape
    enc_q = query @ wq.T                                               # (B, 1, 1)
    enc_r = reviews @ wr.T                                             # (B, M, 1)
    key = jax.nn.softmax((enc_q + enc_r).reshape(B, M, -1), axis=-1)   # (B, M, 1)
    out = jnp.matmul(key.reshape(B, 1, M), reviews)                    # (B, 1, 2H)
    return out.reshape(B, -1)


if __name__ == "__main__":
    batch_size, mem_size, hidden_size = 2, 8, 32

    key = jax.random.PRNGKey(0)
    k1, k2, k3, k4 = jax.random.split(key, 4)
    query = jax.random.normal(k1, (batch_size, 1, hidden_size), dtype=jnp.float32)
    reviews = jax.random.normal(
        k2, (batch_size, mem_size, 2 * hidden_size), dtype=jnp.float32)
    # nn.Linear weight shapes: (1, H) and (1, 2H), bias=False
    wq = jax.random.normal(k3, (1, hidden_size), dtype=jnp.float32) * 0.1
    wr = jax.random.normal(k4, (1, 2 * hidden_size), dtype=jnp.float32) * 0.1

    # Small-shape path (no grid).
    out = review_attention(query, reviews, wq, wr)
    out = jax.block_until_ready(out)
    ref = review_attention_ref(query, reviews, wq, wr)
    assert out.shape == (batch_size, 2 * hidden_size)
    assert out.dtype == reviews.dtype
    assert jnp.allclose(out, ref, atol=1e-5, rtol=1e-5), "mismatch vs reference"

    # Exercise the tiled / pipelined path (grid = (2, 2): B tiles + M-accumulation).
    big_B, big_M, big_H2 = 2, 8192, 256
    big_reviews = jax.random.normal(k2, (big_B, big_M, big_H2), dtype=jnp.float32)
    big_query = jax.random.normal(k1, (big_B, 1, big_H2 // 2), dtype=jnp.float32)
    big_wq = jax.random.normal(k3, (1, big_H2 // 2), dtype=jnp.float32) * 0.1
    big_wr = jax.random.normal(k4, (1, big_H2), dtype=jnp.float32) * 0.1
    big_out = review_attention(big_query, big_reviews, big_wq, big_wr)
    big_out = jax.block_until_ready(big_out)
    big_ref = jnp.sum(big_reviews, axis=1)
    assert big_out.shape == (big_B, big_H2)
    assert jnp.allclose(big_out, big_ref, atol=1e-2, rtol=1e-4), "tiled path mismatch"

    print("KERNEL_OK")
</pallas_src>

<mosaic_0001>
module attributes {stable_mosaic.version = 11 : i64} {
  func.func @_review_attention_small_kernel(%arg0: memref<2x8x64xf32, #tpu.memory_space<vmem>>, %arg1: memref<2x64xf32, #tpu.memory_space<vmem>>) attributes {dimension_semantics = [], scalar_prefetch = 0 : i64, scratch_operands = 0 : i64, tpu.core_type = #tpu.core_type<tc>} {
    %c0 = arith.constant 0 : index
    %c0_0 = arith.constant 0 : index
    %c0_1 = arith.constant 0 : index
    %0 = vector.load %arg0[%c0, %c0_0, %c0_1] : memref<2x8x64xf32, #tpu.memory_space<vmem>>, vector<2x8x64xf32>
    %cst = arith.constant dense<0.000000e+00> : vector<2x64xf32>
    %1 = vector.multi_reduction <add>, %0, %cst [1] : vector<2x8x64xf32> to vector<2x64xf32>
    %c0_2 = arith.constant 0 : index
    %c0_3 = arith.constant 0 : index
    %2 = vector.load %arg1[%c0_2, %c0_3] : memref<2x64xf32, #tpu.memory_space<vmem>>, vector<2x64xf32>
    tpu.vector_store %arg1[%c0_2, %c0_3], %1 {strides = array<i32>} : memref<2x64xf32, #tpu.memory_space<vmem>>, vector<2x64xf32>,
    return
  }
}

</mosaic_0001>

<llo_original>
// kernel: tpu_custom_call.1
$region0: #{tpu_custom_call.1}
  #allocation0 [shape = 'u32[]', space=smem, size = 0x4, offset = 0x4, fixed_abs, tag = 'smem constant byte address 0x4 - core index']
  #allocation1 [shape = 'u32[144,128]{1,0:T(1,128)}', space=vmem, size = 0x12000, scoped, tag = 'internal scratch']
  %s0 = inlined_call_operand.hbm [shape: f32[2,8,64], index: 0, kind: input, shape index: {}]
  %s1 = inlined_call_operand.hbm [shape: f32[2,64], index: 1, kind: output, shape index: {}]
  %s2 = sld [smem:[#allocation0]]
  $region18: #{tpu_custom_call.1} parent=0
    _
  %s4 = ssub.s32 1, %s2
  %s5 = scalar_select 0, %s4, %s2
  $region1: #{tpu_custom_call.1} parent=0
    #allocation2 [shape = 'u8[8192]{0}', space=vmem, size = 0x2000, scoped, tag = 'input window, operand 0, single buffered']
    #allocation3 [shape = 's32[1]{0}', space=sflag, size = 0x4, scoped, tag = 'scoped memory for tpu_custom_call.1']
    #allocation4 [shape = 's32[1]{0}', space=sflag, size = 0x4, scoped, tag = 'scoped memory for tpu_custom_call.1']
    #allocation5 [shape = 'u8[1024]{0}', space=vmem, size = 0x400, scoped, tag = 'output window, operand 0, single buffered']
    %6 = vsyncpa [#allocation3], 0
    %7 = vsyncpa [#allocation4], 0
    // Predicated region
    $region2: #{tpu_custom_call.1} parent=1 // pred_check
      _
    $region3: #{tpu_custom_call.1} parent=1 // pred_check_branch
      %9 = sbr.rel (0) target = $region5
    $region4: #{tpu_custom_call.1} parent=1 // pred_region
      %s11 = ssub.s32 256, 256
      %12 = vsyncadd [#allocation3], %s11
      %s13 = sshll.u32 [#allocation2], 4
      %s14 = int_to_ptr.vmem [resolvable:$true] %s13
      %19 = dma.hbm_to_vmem [thread:$0]  %s0, 256, %s14, [#allocation3], 128, 128, 8
    $region5: #{tpu_custom_call.1} parent=1 // pred_fallthru
      _
    // Predicated region
    $region6: #{tpu_custom_call.1} parent=1 // pred_check
      _
    $region7: #{tpu_custom_call.1} parent=1 // pred_check_branch
      %21 = sbr.rel (0) target = $region9
    $region8: #{tpu_custom_call.1} parent=1 // pred_region
      %22 = dma.done [#allocation3], 256
    $region9: #{tpu_custom_call.1} parent=1 // pred_fallthru
      _
    %v23 = vld [vmem:[#allocation2] sm:$0xff]
    %v24 = vld [vmem:[#allocation2 + $0x8] sm:$0xff]
    %vm25 = vcmask 523264
    %v26 = vsel %vm25, %v23, 0.0
    %v27 = vrot.slane %v26, 4
    %v28 = vadd.f32 %v26, %v27
    %v29 = vrot.slane %v28, 2
    %v30 = vadd.f32 %v28, %v29
    %v31 = vrot.slane %v30, 1
    %v32 = vadd.f32 %v30, %v31
    %v33 = vsel %vm25, %v24, 0.0
    %v34 = vrot.slane %v33, 4
    %v35 = vadd.f32 %v33, %v34
    %v36 = vrot.slane %v35, 2
    %v37 = vadd.f32 %v35, %v36
    %v38 = vrot.slane %v37, 1
    %v39 = vadd.f32 %v37, %v38
    %vm42 = vcmask 1041409
    %v43 = vsel %vm42, %v39, %v32
    %vm45 = vcmask 517120
    %46 = vst.msk [vmem:[#allocation5] sm:$0x3] %vm45, %v43
    // Predicated region
    $region10: #{tpu_custom_call.1} parent=1 // pred_check
      _
    $region11: #{tpu_custom_call.1} parent=1 // pred_check_branch
      %48 = sbr.rel (0) target = $region13
    $region12: #{tpu_custom_call.1} parent=1 // pred_region
      %s50 = ssub.s32 32, 32
      %51 = vsyncadd [#allocation4], %s50
      %s53 = sshll.u32 [#allocation5], 4
      %s54 = int_to_ptr.vmem [resolvable:$true] %s53
      %56 = dma.vmem_to_hbm [thread:$0]  %s54, 32, %s1, [#allocation4]
    $region13: #{tpu_custom_call.1} parent=1 // pred_fallthru
      _
    // Predicated region
    $region14: #{tpu_custom_call.1} parent=1 // pred_check
      _
    $region15: #{tpu_custom_call.1} parent=1 // pred_check_branch
      %58 = sbr.rel (0) target = $region17
    $region16: #{tpu_custom_call.1} parent=1 // pred_region
      %59 = dma.done [#allocation4], 32
    $region17: #{tpu_custom_call.1} parent=1 // pred_fallthru
      _
    %60 = vsyncpa [#allocation3], 1
    %61 = vsyncpa [#allocation4], 1

</llo_original>
